<compile_context>
chip_gen: v7x
topology: tpu7x:2x2x1
jax: 0.10.0
libtpu: 0.0.40
codegen_flags: <defaults>
</compile_context>

<pallas_src>
import functools

import jax
import jax.numpy as jnp
from jax.experimental import pallas as pl
from jax.experimental.pallas import tpu as pltpu

EPS = 1e-5          # PyTorch BatchNorm1d default
NEG_SLOPE = 0.01    # F.leaky_relu default negative_slope

D_IN, D_H1, D_H2, D_OUT = 11, 128, 256, 4
D_PAD = 128          # lane-dense padded width of the final layer output
DEFAULT_TM = 512     # batch tile for the tiled path (>=256 keeps the MXU M-side full)


# ---------------------------------------------------------------------------
# in-kernel math helpers (shared by both paths)
# ---------------------------------------------------------------------------

def _leaky_relu(x):
    return jnp.where(x >= 0, x, NEG_SLOPE * x)


def _bn_stats_full(h, inv_n):
    """Training-mode batch stats in f32, single pass: var = E[x^2] - E[x]^2."""
    s = jnp.sum(h, axis=0, keepdims=True)
    sq = jnp.sum(h * h, axis=0, keepdims=True)
    mu = s * inv_n
    var = jnp.maximum(sq * inv_n - mu * mu, 0.0)
    return mu, var


def _bn_stats_from_partial(ps, inv_n):
    """ps: [nt, 2, C] per-tile (sum, sum-of-squares) partials -> (mu, var)."""
    sums = jnp.sum(ps, axis=0)                       # [2, C]
    mu = sums[0:1, :] * inv_n
    var = jnp.maximum(sums[1:2, :] * inv_n - mu * mu, 0.0)
    return mu, var


def _bn_linear_lrelu(h, mu, var, gamma, beta, w, b):
    """LeakyReLU( bn(h) @ W + b ) with the BN affine folded into the Linear.

    bn(h) @ W + b == (h * scale) @ W + (shift @ W + b)
    scale/shift/bias math in f32; matmul operands cast to bf16 (native MXU)
    with f32 accumulation.
    """
    scale = gamma * jax.lax.rsqrt(var + EPS)                             # [1, Cin]
    shift = beta - mu * scale                                            # [1, Cin]
    b_fold = jnp.dot(shift, w, preferred_element_type=jnp.float32) + b   # [1, Cout]
    y = jnp.dot((h * scale).astype(jnp.bfloat16), w.astype(jnp.bfloat16),
                preferred_element_type=jnp.float32) + b_fold
    return _leaky_relu(y)


# ---------------------------------------------------------------------------
# kernels
# ---------------------------------------------------------------------------

def _fused_kernel(x_ref, gb_in_ref, p128_ref, p256_ref,
                  w1_ref, w2_ref, w3_ref, o_ref):
    """Whole forward pass in one VMEM-resident kernel (small-batch path)."""
    inv_n = 1.0 / float(x_ref.shape[0])
    x = x_ref[...]
    gbi = gb_in_ref[...]    # [2, 11]  rows: gamma_in, beta_in
    p128 = p128_ref[...]    # [4, 128] rows: b1, gamma1, beta1, b3 (padded)
    p256 = p256_ref[...]    # [3, 256] rows: b2, gamma2, beta2

    mu, var = _bn_stats_full(x, inv_n)
    h1 = _bn_linear_lrelu(x, mu, var, gbi[0:1], gbi[1:2], w1_ref[...], p128[0:1])

    mu, var = _bn_stats_full(h1, inv_n)
    h2 = _bn_linear_lrelu(h1, mu, var, p128[1:2], p128[2:3], w2_ref[...], p256[0:1])

    mu, var = _bn_stats_full(h2, inv_n)
    o_ref[...] = _bn_linear_lrelu(h2, mu, var, p256[1:2], p256[2:3],
                                  w3_ref[...], p128[3:4])


def _stats_kernel(x_ref, ps_ref):
    """Per-tile partial (sum, sum of squares) of the network input."""
    x = x_ref[...]
    s = jnp.sum(x, axis=0, keepdims=True)
    sq = jnp.sum(x * x, axis=0, keepdims=True)
    ps_ref[...] = jnp.concatenate([s, sq], axis=0)[None]    # [1, 2, C]


def _make_layer_kernel(n_real, tm, emit_stats):
    """BN(prev stats) folded into Linear + LeakyReLU on one batch tile."""
    inv_n = 1.0 / float(n_real)

    def _body(h_ref, ps_ref, gb_ref, w_ref, b_ref):
        gb = gb_ref[...]
        mu, var = _bn_stats_from_partial(ps_ref[...], inv_n)
        return _bn_linear_lrelu(h_ref[...], mu, var, gb[0:1], gb[1:2],
                                w_ref[...], b_ref[...])

    if not emit_stats:
        def kernel(h_ref, ps_ref, gb_ref, w_ref, b_ref, o_ref):
            o_ref[...] = _body(h_ref, ps_ref, gb_ref, w_ref, b_ref)
        return kernel

    def kernel(h_ref, ps_ref, gb_ref, w_ref, b_ref, o_ref, os_ref):
        y = _body(h_ref, ps_ref, gb_ref, w_ref, b_ref)
        o_ref[...] = y
        # masked per-tile partials for the *next* BN; zero-padded batch rows
        # (global row index >= n_real) are excluded from the statistics.
        row = jax.lax.broadcasted_iota(jnp.int32, (tm, 1), 0) + pl.program_id(0) * tm
        ym = y * (row < n_real).astype(y.dtype)
        s = jnp.sum(ym, axis=0, keepdims=True)
        sq = jnp.sum(ym * ym, axis=0, keepdims=True)
        os_ref[...] = jnp.concatenate([s, sq], axis=0)[None]
    return kernel


# ---------------------------------------------------------------------------
# pallas_call wrappers
# ---------------------------------------------------------------------------

def _clamp_vmem(nbytes):
    return int(min(max(nbytes, 4 * 1024 * 1024), 32 * 1024 * 1024))


def _forward_fused(x, params):
    n = x.shape[0]
    args = (x, params["gb_in"], params["p128"], params["p256"],
            params["w1"], params["w2"], params["w3p"])
    vmem = pl.BlockSpec(memory_space=pltpu.MemorySpace.VMEM)
    acts = 4 * n * (D_IN + D_H1 + D_H2 + D_PAD)
    wts = 4 * (D_IN * D_H1 + D_H1 * D_H2 + D_H2 * D_PAD
               + 2 * D_IN + 4 * D_H1 + 3 * D_H2)
    flops = 2 * n * (D_IN * D_H1 + D_H1 * D_H2 + D_H2 * D_PAD)
    out = pl.pallas_call(
        _fused_kernel,
        out_shape=jax.ShapeDtypeStruct((n, D_PAD), jnp.float32),
        in_specs=[vmem] * len(args),
        out_specs=vmem,
        compiler_params=pltpu.CompilerParams(
            vmem_limit_bytes=_clamp_vmem(4 * (acts + wts))),
        cost_estimate=pl.CostEstimate(flops=int(flops),
                                      transcendentals=int(D_IN + D_H1 + D_H2),
                                      bytes_accessed=int(4 * n * (D_IN + D_PAD) + wts)),
    )(*args)
    return out[:, :D_OUT]           # lane-dense store in kernel, slice outside


def _stats_call(x, tm, nt):
    n, c = x.shape
    return pl.pallas_call(
        _stats_kernel,
        grid=(nt,),
        in_specs=[pl.BlockSpec((tm, c), lambda i: (i, 0))],
        out_specs=pl.BlockSpec((1, 2, c), lambda i: (i, 0, 0)),
        out_shape=jax.ShapeDtypeStruct((nt, 2, c), jnp.float32),
        compiler_params=pltpu.CompilerParams(
            dimension_semantics=("parallel",),
            vmem_limit_bytes=_clamp_vmem(16 * tm * c)),
        cost_estimate=pl.CostEstimate(flops=int(3 * n * c), transcendentals=0,
                                      bytes_accessed=int(4 * (n * c + nt * 2 * c))),
    )(x)


def _layer_call(h, ps, gb, w, b, *, n_real, tm, emit_stats):
    npad, cin = h.shape
    cout = w.shape[1]
    nt = npad // tm
    kernel = _make_layer_kernel(n_real, tm, emit_stats)
    in_specs = [
        pl.BlockSpec((tm, cin), lambda i: (i, 0)),         # activation tile
        pl.BlockSpec((nt, 2, cin), lambda i: (0, 0, 0)),   # partial stats (resident)
        pl.BlockSpec((2, cin), lambda i: (0, 0)),          # gamma/beta pack
        pl.BlockSpec((cin, cout), lambda i: (0, 0)),       # weight
        pl.BlockSpec((1, cout), lambda i: (0, 0)),         # bias
    ]
    h_spec = pl.BlockSpec((tm, cout), lambda i: (i, 0))
    if emit_stats:
        out_shape = (jax.ShapeDtypeStruct((npad, cout), jnp.float32),
                     jax.ShapeDtypeStruct((nt, 2, cout), jnp.float32))
        out_specs = (h_spec, pl.BlockSpec((1, 2, cout), lambda i: (i, 0, 0)))
    else:
        out_shape = jax.ShapeDtypeStruct((npad, cout), jnp.float32)
        out_specs = h_spec
    tiles = 8 * tm * (cin + cout)                                  # double-buffered f32 tiles
    resident = 4 * (cin * cout + nt * 2 * (cin + cout) + 3 * cin + cout)
    scratch = 2 * (tm * cin + cin * cout) + 4 * tm * cout          # bf16 copies + f32 temps
    return pl.pallas_call(
        kernel,
        grid=(nt,),
        in_specs=in_specs,
        out_specs=out_specs,
        out_shape=out_shape,
        compiler_params=pltpu.CompilerParams(
            dimension_semantics=("parallel",),   # shard batch tiles across TCs (v7x)
            vmem_limit_bytes=_clamp_vmem(4 * (tiles + resident + scratch))),
        cost_estimate=pl.CostEstimate(
            flops=int(2 * npad * cin * cout),
            transcendentals=int(cin),
            bytes_accessed=int(4 * (npad * (cin + cout) + cin * cout
                                    + nt * 2 * (cin + cout) + 3 * cin + cout))),
    )(h, ps, gb, w, b)


def _forward_tiled(x, params, tm):
    """Two-pass-BN path: stats pass + per-layer fold/matmul passes, batch-tiled."""
    n = x.shape[0]
    nt = -(-n // tm)
    npad = nt * tm
    if npad != n:
        x = jnp.pad(x, ((0, npad - n), (0, 0)))  # zero rows: excluded from all stats
    x_ps = _stats_call(x, tm, nt)
    h1, h1_ps = _layer_call(x, x_ps, params["gb_in"], params["w1"], params["b1"],
                            n_real=n, tm=tm, emit_stats=True)
    h2, h2_ps = _layer_call(h1, h1_ps, params["gb1"], params["w2"], params["b2"],
                            n_real=n, tm=tm, emit_stats=True)
    out = _layer_call(h2, h2_ps, params["gb2"], params["w3p"], params["b3p"],
                      n_real=n, tm=tm, emit_stats=False)
    return out[:n, :D_OUT]


@functools.partial(jax.jit, static_argnames=("tm",))
def net_forward(x, params, tm=DEFAULT_TM):
    n = x.shape[0]
    if n <= tm:
        return _forward_fused(x, params)      # small batch: single fused kernel
    return _forward_tiled(x, params, tm)      # large batch: tiled / megacore path


# ---------------------------------------------------------------------------
# parameters + pure-JAX reference
# ---------------------------------------------------------------------------

def init_params(key):
    """PyTorch-style init; packed/padded copies are precomputed for the kernels."""
    ks = jax.random.split(key, 6)

    def lin(kw, kb, din, dout):
        bound = 1.0 / float(din) ** 0.5
        w = jax.random.uniform(kw, (din, dout), jnp.float32, -bound, bound)
        b = jax.random.uniform(kb, (1, dout), jnp.float32, -bound, bound)
        return w, b

    w1, b1 = lin(ks[0], ks[1], D_IN, D_H1)
    w2, b2 = lin(ks[2], ks[3], D_H1, D_H2)
    w3, b3 = lin(ks[4], ks[5], D_H2, D_OUT)

    g_in, be_in = jnp.ones((1, D_IN), jnp.float32), jnp.zeros((1, D_IN), jnp.float32)
    g1, be1 = jnp.ones((1, D_H1), jnp.float32), jnp.zeros((1, D_H1), jnp.float32)
    g2, be2 = jnp.ones((1, D_H2), jnp.float32), jnp.zeros((1, D_H2), jnp.float32)

    # lane-dense final layer: zero-pad to 128 output columns (sliced back to 4 outside)
    w3p = jnp.pad(w3, ((0, 0), (0, D_PAD - D_OUT)))
    b3p = jnp.pad(b3, ((0, 0), (0, D_PAD - D_OUT)))

    return dict(
        # raw tensors (used by the pure-JAX reference)
        w1=w1, b1=b1, w2=w2, b2=b2, w3=w3, b3=b3,
        g_in=g_in, be_in=be_in, g1=g1, be1=be1, g2=g2, be2=be2,
        # padded / packed tensors for the kernels (fewer, larger DMAs)
        w3p=w3p, b3p=b3p,
        gb_in=jnp.concatenate([g_in, be_in], axis=0),        # [2, 11]
        gb1=jnp.concatenate([g1, be1], axis=0),              # [2, 128]
        gb2=jnp.concatenate([g2, be2], axis=0),              # [2, 256]
        p128=jnp.concatenate([b1, g1, be1, b3p], axis=0),    # [4, 128]
        p256=jnp.concatenate([b2, g2, be2], axis=0),         # [3, 256]
    )


def net_forward_ref(x, p):
    """Pure-JAX f32 reference (PyTorch training-mode BatchNorm semantics)."""
    # TODO(synk): running_mean/running_var buffers are not tracked (inference-only fwd).
    def bn(h, g, b):
        mu = jnp.mean(h, axis=0, keepdims=True)
        var = jnp.mean(jnp.square(h - mu), axis=0, keepdims=True)
        return (h - mu) * jax.lax.rsqrt(var + EPS) * g + b

    def lrelu(h):
        return jnp.where(h >= 0, h, NEG_SLOPE * h)

    h = bn(x, p["g_in"], p["be_in"])
    h = bn(lrelu(h @ p["w1"] + p["b1"]), p["g1"], p["be1"])
    h = bn(lrelu(h @ p["w2"] + p["b2"]), p["g2"], p["be2"])
    return lrelu(h @ p["w3"] + p["b3"])


if __name__ == "__main__":
    key = jax.random.PRNGKey(0)
    k_x, k_p = jax.random.split(key)
    params = init_params(k_p)

    # 1) small batch -> single fused kernel (latency-oriented path)
    x_small = jax.random.normal(k_x, (64, D_IN), jnp.float32)
    out_small = jax.block_until_ready(net_forward(x_small, params))
    ref_small = net_forward_ref(x_small, params)
    assert out_small.shape == (64, D_OUT)
    assert jnp.allclose(out_small, ref_small, atol=5e-2, rtol=5e-2), "fused path mismatch"

    # 2) batch-tiled path (grid + padding + masked two-pass BN stats), small tile
    #    size chosen only to exercise multiple grid steps at a tiny shape.
    x_tiled = jax.random.normal(jax.random.fold_in(k_x, 1), (40, D_IN), jnp.float32)
    out_tiled = jax.block_until_ready(net_forward(x_tiled, params, tm=16))
    ref_tiled = net_forward_ref(x_tiled, params)
    assert out_tiled.shape == (40, D_OUT)
    assert jnp.allclose(out_tiled, ref_tiled, atol=5e-2, rtol=5e-2), "tiled path mismatch"

    print("KERNEL_OK")
</pallas_src>

<mosaic_0001>
module attributes {stable_mosaic.version = 11 : i64} {
  func.func @_fused_kernel(%arg0: memref<64x11xf32, #tpu.memory_space<vmem>>, %arg1: memref<2x11xf32, #tpu.memory_space<vmem>>, %arg2: memref<4x128xf32, #tpu.memory_space<vmem>>, %arg3: memref<3x256xf32, #tpu.memory_space<vmem>>, %arg4: memref<11x128xf32, #tpu.memory_space<vmem>>, %arg5: memref<128x256xf32, #tpu.memory_space<vmem>>, %arg6: memref<256x128xf32, #tpu.memory_space<vmem>>, %arg7: memref<64x128xf32, #tpu.memory_space<vmem>>) attributes {dimension_semantics = [], scalar_prefetch = 0 : i64, scratch_operands = 0 : i64, tpu.core_type = #tpu.core_type<tc>} {
    %c0 = arith.constant 0 : index
    %c0_0 = arith.constant 0 : index
    %0 = vector.load %arg0[%c0, %c0_0] : memref<64x11xf32, #tpu.memory_space<vmem>>, vector<64x11xf32>
    %c0_1 = arith.constant 0 : index
    %c0_2 = arith.constant 0 : index
    %1 = vector.load %arg1[%c0_1, %c0_2] : memref<2x11xf32, #tpu.memory_space<vmem>>, vector<2x11xf32>
    %c0_3 = arith.constant 0 : index
    %c0_4 = arith.constant 0 : index
    %2 = vector.load %arg2[%c0_3, %c0_4] : memref<4x128xf32, #tpu.memory_space<vmem>>, vector<4x128xf32>
    %c0_5 = arith.constant 0 : index
    %c0_6 = arith.constant 0 : index
    %3 = vector.load %arg3[%c0_5, %c0_6] : memref<3x256xf32, #tpu.memory_space<vmem>>, vector<3x256xf32>
    %cst = arith.constant dense<0.000000e+00> : vector<11xf32>
    %4 = vector.multi_reduction <add>, %0, %cst [0] : vector<64x11xf32> to vector<11xf32>
    %5 = vector.shape_cast %4 : vector<11xf32> to vector<1x11xf32>
    %6 = arith.mulf %0, %0 : vector<64x11xf32>
    %cst_7 = arith.constant dense<0.000000e+00> : vector<11xf32>
    %7 = vector.multi_reduction <add>, %6, %cst_7 [0] : vector<64x11xf32> to vector<11xf32>
    %8 = vector.shape_cast %7 : vector<11xf32> to vector<1x11xf32>
    %cst_8 = arith.constant 1.562500e-02 : f32
    %9 = vector.broadcast %cst_8 : f32 to vector<1x11xf32>
    %10 = arith.mulf %5, %9 : vector<1x11xf32>
    %cst_9 = arith.constant 1.562500e-02 : f32
    %11 = vector.broadcast %cst_9 : f32 to vector<1x11xf32>
    %12 = arith.mulf %8, %11 : vector<1x11xf32>
    %13 = arith.mulf %10, %10 : vector<1x11xf32>
    %14 = arith.subf %12, %13 : vector<1x11xf32>
    %cst_10 = arith.constant 0.000000e+00 : f32
    %15 = vector.broadcast %cst_10 : f32 to vector<1x11xf32>
    %16 = arith.maximumf %14, %15 : vector<1x11xf32>
    %17 = vector.extract_strided_slice %1 {offsets = [0, 0], sizes = [1, 11], strides = [1, 1]} : vector<2x11xf32> to vector<1x11xf32>
    %18 = vector.extract_strided_slice %1 {offsets = [1, 0], sizes = [1, 11], strides = [1, 1]} : vector<2x11xf32> to vector<1x11xf32>
    %c0_11 = arith.constant 0 : index
    %c0_12 = arith.constant 0 : index
    %19 = vector.load %arg4[%c0_11, %c0_12] : memref<11x128xf32, #tpu.memory_space<vmem>>, vector<11x128xf32>
    %20 = vector.extract_strided_slice %2 {offsets = [0, 0], sizes = [1, 128], strides = [1, 1]} : vector<4x128xf32> to vector<1x128xf32>
    %cst_13 = arith.constant 9.99999974E-6 : f32
    %21 = vector.broadcast %cst_13 : f32 to vector<1x11xf32>
    %22 = arith.addf %16, %21 : vector<1x11xf32>
    %23 = math.rsqrt %22 : vector<1x11xf32>
    %24 = arith.mulf %17, %23 : vector<1x11xf32>
    %25 = arith.mulf %10, %24 : vector<1x11xf32>
    %26 = arith.subf %18, %25 : vector<1x11xf32>
    %cst_14 = arith.constant dense<0.000000e+00> : vector<1x128xf32>
    %27 = tpu.matmul %26, %19, %cst_14 {dimension_numbers = #tpu.dot_dimension_numbers<[1], [0], [0], [1], [0, 0, 1, 1], [], []>} : vector<1x11xf32>, vector<11x128xf32>, vector<1x128xf32> -> vector<1x128xf32>
    %28 = arith.addf %27, %20 : vector<1x128xf32>
    %29 = vector.broadcast %24 : vector<1x11xf32> to vector<64x11xf32>
    %30 = arith.mulf %0, %29 : vector<64x11xf32>
    %31 = arith.truncf %30 : vector<64x11xf32> to vector<64x11xbf16>
    %32 = arith.truncf %19 : vector<11x128xf32> to vector<11x128xbf16>
    %cst_15 = arith.constant dense<0.000000e+00> : vector<64x128xf32>
    %33 = tpu.matmul %31, %32, %cst_15 {dimension_numbers = #tpu.dot_dimension_numbers<[1], [0], [0], [1], [0, 0, 1, 1], [], []>} : vector<64x11xbf16>, vector<11x128xbf16>, vector<64x128xf32> -> vector<64x128xf32>
    %34 = vector.broadcast %28 : vector<1x128xf32> to vector<64x128xf32>
    %35 = arith.addf %33, %34 : vector<64x128xf32>
    %cst_16 = arith.constant 0.000000e+00 : f32
    %36 = vector.broadcast %cst_16 : f32 to vector<64x128xf32>
    %37 = arith.cmpf oge, %35, %36 : vector<64x128xf32>
    %cst_17 = arith.constant 0.00999999977 : f32
    %38 = vector.broadcast %cst_17 : f32 to vector<64x128xf32>
    %39 = arith.mulf %38, %35 : vector<64x128xf32>
    %40 = arith.select %37, %35, %39 : vector<64x128xi1>, vector<64x128xf32>
    %cst_18 = arith.constant dense<0.000000e+00> : vector<128xf32>
    %41 = vector.multi_reduction <add>, %40, %cst_18 [0] : vector<64x128xf32> to vector<128xf32>
    %42 = vector.shape_cast %41 : vector<128xf32> to vector<1x128xf32>
    %43 = arith.mulf %40, %40 : vector<64x128xf32>
    %cst_19 = arith.constant dense<0.000000e+00> : vector<128xf32>
    %44 = vector.multi_reduction <add>, %43, %cst_19 [0] : vector<64x128xf32> to vector<128xf32>
    %45 = vector.shape_cast %44 : vector<128xf32> to vector<1x128xf32>
    %cst_20 = arith.constant 1.562500e-02 : f32
    %46 = vector.broadcast %cst_20 : f32 to vector<1x128xf32>
    %47 = arith.mulf %42, %46 : vector<1x128xf32>
    %cst_21 = arith.constant 1.562500e-02 : f32
    %48 = vector.broadcast %cst_21 : f32 to vector<1x128xf32>
    %49 = arith.mulf %45, %48 : vector<1x128xf32>
    %50 = arith.mulf %47, %47 : vector<1x128xf32>
    %51 = arith.subf %49, %50 : vector<1x128xf32>
    %cst_22 = arith.constant 0.000000e+00 : f32
    %52 = vector.broadcast %cst_22 : f32 to vector<1x128xf32>
    %53 = arith.maximumf %51, %52 : vector<1x128xf32>
    %54 = vector.extract_strided_slice %2 {offsets = [1, 0], sizes = [1, 128], strides = [1, 1]} : vector<4x128xf32> to vector<1x128xf32>
    %55 = vector.extract_strided_slice %2 {offsets = [2, 0], sizes = [1, 128], strides = [1, 1]} : vector<4x128xf32> to vector<1x128xf32>
    %c0_23 = arith.constant 0 : index
    %c0_24 = arith.constant 0 : index
    %56 = vector.load %arg5[%c0_23, %c0_24] : memref<128x256xf32, #tpu.memory_space<vmem>>, vector<128x256xf32>
    %57 = vector.extract_strided_slice %3 {offsets = [0, 0], sizes = [1, 256], strides = [1, 1]} : vector<3x256xf32> to vector<1x256xf32>
    %cst_25 = arith.constant 9.99999974E-6 : f32
    %58 = vector.broadcast %cst_25 : f32 to vector<1x128xf32>
    %59 = arith.addf %53, %58 : vector<1x128xf32>
    %60 = math.rsqrt %59 : vector<1x128xf32>
    %61 = arith.mulf %54, %60 : vector<1x128xf32>
    %62 = arith.mulf %47, %61 : vector<1x128xf32>
    %63 = arith.subf %55, %62 : vector<1x128xf32>
    %cst_26 = arith.constant dense<0.000000e+00> : vector<1x256xf32>
    %64 = tpu.matmul %63, %56, %cst_26 {dimension_numbers = #tpu.dot_dimension_numbers<[1], [0], [0], [1], [0, 0, 1, 1], [], []>} : vector<1x128xf32>, vector<128x256xf32>, vector<1x256xf32> -> vector<1x256xf32>
    %65 = arith.addf %64, %57 : vector<1x256xf32>
    %66 = vector.broadcast %61 : vector<1x128xf32> to vector<64x128xf32>
    %67 = arith.mulf %40, %66 : vector<64x128xf32>
    %68 = arith.truncf %67 : vector<64x128xf32> to vector<64x128xbf16>
    %69 = arith.truncf %56 : vector<128x256xf32> to vector<128x256xbf16>
    %cst_27 = arith.constant dense<0.000000e+00> : vector<64x256xf32>
    %70 = tpu.matmul %68, %69, %cst_27 {dimension_numbers = #tpu.dot_dimension_numbers<[1], [0], [0], [1], [0, 0, 1, 1], [], []>} : vector<64x128xbf16>, vector<128x256xbf16>, vector<64x256xf32> -> vector<64x256xf32>
    %71 = vector.broadcast %65 : vector<1x256xf32> to vector<64x256xf32>
    %72 = arith.addf %70, %71 : vector<64x256xf32>
    %cst_28 = arith.constant 0.000000e+00 : f32
    %73 = vector.broadcast %cst_28 : f32 to vector<64x256xf32>
    %74 = arith.cmpf oge, %72, %73 : vector<64x256xf32>
    %cst_29 = arith.constant 0.00999999977 : f32
    %75 = vector.broadcast %cst_29 : f32 to vector<64x256xf32>
    %76 = arith.mulf %75, %72 : vector<64x256xf32>
    %77 = arith.select %74, %72, %76 : vector<64x256xi1>, vector<64x256xf32>
    %cst_30 = arith.constant dense<0.000000e+00> : vector<256xf32>
    %78 = vector.multi_reduction <add>, %77, %cst_30 [0] : vector<64x256xf32> to vector<256xf32>
    %79 = vector.shape_cast %78 : vector<256xf32> to vector<1x256xf32>
    %80 = arith.mulf %77, %77 : vector<64x256xf32>
    %cst_31 = arith.constant dense<0.000000e+00> : vector<256xf32>
    %81 = vector.multi_reduction <add>, %80, %cst_31 [0] : vector<64x256xf32> to vector<256xf32>
    %82 = vector.shape_cast %81 : vector<256xf32> to vector<1x256xf32>
    %cst_32 = arith.constant 1.562500e-02 : f32
    %83 = vector.broadcast %cst_32 : f32 to vector<1x256xf32>
    %84 = arith.mulf %79, %83 : vector<1x256xf32>
    %cst_33 = arith.constant 1.562500e-02 : f32
    %85 = vector.broadcast %cst_33 : f32 to vector<1x256xf32>
    %86 = arith.mulf %82, %85 : vector<1x256xf32>
    %87 = arith.mulf %84, %84 : vector<1x256xf32>
    %88 = arith.subf %86, %87 : vector<1x256xf32>
    %cst_34 = arith.constant 0.000000e+00 : f32
    %89 = vector.broadcast %cst_34 : f32 to vector<1x256xf32>
    %90 = arith.maximumf %88, %89 : vector<1x256xf32>
    %91 = vector.extract_strided_slice %3 {offsets = [1, 0], sizes = [1, 256], strides = [1, 1]} : vector<3x256xf32> to vector<1x256xf32>
    %92 = vector.extract_strided_slice %3 {offsets = [2, 0], sizes = [1, 256], strides = [1, 1]} : vector<3x256xf32> to vector<1x256xf32>
    %c0_35 = arith.constant 0 : index
    %c0_36 = arith.constant 0 : index
    %93 = vector.load %arg6[%c0_35, %c0_36] : memref<256x128xf32, #tpu.memory_space<vmem>>, vector<256x128xf32>
    %94 = vector.extract_strided_slice %2 {offsets = [3, 0], sizes = [1, 128], strides = [1, 1]} : vector<4x128xf32> to vector<1x128xf32>
    %cst_37 = arith.constant 9.99999974E-6 : f32
    %95 = vector.broadcast %cst_37 : f32 to vector<1x256xf32>
    %96 = arith.addf %90, %95 : vector<1x256xf32>
    %97 = math.rsqrt %96 : vector<1x256xf32>
    %98 = arith.mulf %91, %97 : vector<1x256xf32>
    %99 = arith.mulf %84, %98 : vector<1x256xf32>
    %100 = arith.subf %92, %99 : vector<1x256xf32>
    %cst_38 = arith.constant dense<0.000000e+00> : vector<1x128xf32>
    %101 = tpu.matmul %100, %93, %cst_38 {dimension_numbers = #tpu.dot_dimension_numbers<[1], [0], [0], [1], [0, 0, 1, 1], [], []>} : vector<1x256xf32>, vector<256x128xf32>, vector<1x128xf32> -> vector<1x128xf32>
    %102 = arith.addf %101, %94 : vector<1x128xf32>
    %103 = vector.broadcast %98 : vector<1x256xf32> to vector<64x256xf32>
    %104 = arith.mulf %77, %103 : vector<64x256xf32>
    %105 = arith.truncf %104 : vector<64x256xf32> to vector<64x256xbf16>
    %106 = arith.truncf %93 : vector<256x128xf32> to vector<256x128xbf16>
    %cst_39 = arith.constant dense<0.000000e+00> : vector<64x128xf32>
    %107 = tpu.matmul %105, %106, %cst_39 {dimension_numbers = #tpu.dot_dimension_numbers<[1], [0], [0], [1], [0, 0, 1, 1], [], []>} : vector<64x256xbf16>, vector<256x128xbf16>, vector<64x128xf32> -> vector<64x128xf32>
    %108 = vector.broadcast %102 : vector<1x128xf32> to vector<64x128xf32>
    %109 = arith.addf %107, %108 : vector<64x128xf32>
    %cst_40 = arith.constant 0.000000e+00 : f32
    %110 = vector.broadcast %cst_40 : f32 to vector<64x128xf32>
    %111 = arith.cmpf oge, %109, %110 : vector<64x128xf32>
    %cst_41 = arith.constant 0.00999999977 : f32
    %112 = vector.broadcast %cst_41 : f32 to vector<64x128xf32>
    %113 = arith.mulf %112, %109 : vector<64x128xf32>
    %114 = arith.select %111, %109, %113 : vector<64x128xi1>, vector<64x128xf32>
    %c0_42 = arith.constant 0 : index
    %c0_43 = arith.constant 0 : index
    %115 = vector.load %arg7[%c0_42, %c0_43] : memref<64x128xf32, #tpu.memory_space<vmem>>, vector<64x128xf32>
    tpu.vector_store %arg7[%c0_42, %c0_43], %114 {strides = array<i32>} : memref<64x128xf32, #tpu.memory_space<vmem>>, vector<64x128xf32>,
    return
  }
}

</mosaic_0001>

<llo_original>
// kernel: net_forward.1
$region0: #{net_forward.1}
  #allocation0 [shape = 'u32[]', space=smem, size = 0x4, offset = 0x4, fixed_abs, tag = 'smem constant byte address 0x4 - core index']
  #allocation1 [shape = 'u32[144,128]{1,0:T(1,128)}', space=vmem, size = 0x12000, scoped, tag = 'internal scratch']
  %s0 = inlined_call_operand.vmem [shape: f32[64,11], index: 0, kind: input, shape index: {}]
  %s1 = inlined_call_operand.vmem [shape: f32[2,11], index: 1, kind: input, shape index: {}]
  %s2 = inlined_call_operand.vmem [shape: f32[4,128], index: 2, kind: input, shape index: {}]
  %s3 = inlined_call_operand.vmem [shape: f32[3,256], index: 3, kind: input, shape index: {}]
  %s4 = inlined_call_operand.vmem [shape: f32[11,128], index: 4, kind: input, shape index: {}]
  %s5 = inlined_call_operand.hbm [shape: f32[128,256], index: 5, kind: input, shape index: {}]
  %s6 = inlined_call_operand.hbm [shape: f32[256,128], index: 6, kind: input, shape index: {}]
  %s7 = inlined_call_operand.vmem [shape: f32[64,128], index: 7, kind: output, shape index: {}]
  %s8 = sld [smem:[#allocation0]]
  $region46: #{net_forward.1} parent=0
    _
  %s10 = ssub.s32 1, %s8
  %s11 = scalar_select 0, %s10, %s8
  $region1: #{net_forward.1} parent=0
    #allocation2 [shape = 'u8[131072]{0}', space=vmem, size = 0x20000, scoped, tag = 'input window, operand 5, single buffered']
    #allocation3 [shape = 's32[1]{0}', space=sflag, size = 0x4, scoped, tag = 'scoped memory for net_forward.1']
    #allocation4 [shape = 'u8[131072]{0}', space=vmem, size = 0x20000, scoped, tag = 'input window, operand 6, single buffered']
    #allocation5 [shape = 's32[1]{0}', space=sflag, size = 0x4, scoped, tag = 'scoped memory for net_forward.1']
    %12 = vsyncpa [#allocation3], 0
    %13 = vsyncpa [#allocation5], 0
    // Predicated region
    $region2: #{net_forward.1} parent=1 // pred_check
      _
    $region3: #{net_forward.1} parent=1 // pred_check_branch
      %15 = sbr.rel (0) target = $region5
    $region4: #{net_forward.1} parent=1 // pred_region
      _
    $region5: #{net_forward.1} parent=1 // pred_fallthru
      _
    // Predicated region
    $region6: #{net_forward.1} parent=1 // pred_check
      _
    $region7: #{net_forward.1} parent=1 // pred_check_branch
      %17 = sbr.rel (0) target = $region9
    $region8: #{net_forward.1} parent=1 // pred_region
      _
    $region9: #{net_forward.1} parent=1 // pred_fallthru
      _
    // Predicated region
    $region10: #{net_forward.1} parent=1 // pred_check
      _
    $region11: #{net_forward.1} parent=1 // pred_check_branch
      %19 = sbr.rel (0) target = $region13
    $region12: #{net_forward.1} parent=1 // pred_region
      _
    $region13: #{net_forward.1} parent=1 // pred_fallthru
      _
    // Predicated region
    $region14: #{net_forward.1} parent=1 // pred_check
      _
    $region15: #{net_forward.1} parent=1 // pred_check_branch
      %21 = sbr.rel (0) target = $region17
    $region16: #{net_forward.1} parent=1 // pred_region
      _
    $region17: #{net_forward.1} parent=1 // pred_fallthru
      _
    // Predicated region
    $region18: #{net_forward.1} parent=1 // pred_check
      _
    $region19: #{net_forward.1} parent=1 // pred_check_branch
      %23 = sbr.rel (0) target = $region21
    $region20: #{net_forward.1} parent=1 // pred_region
      _
    $region21: #{net_forward.1} parent=1 // pred_fallthru
      _
    // Predicated region
    $region22: #{net_forward.1} parent=1 // pred_check
      _
    $region23: #{net_forward.1} parent=1 // pred_check_branch
      %25 = sbr.rel (0) target = $region25
    $region24: #{net_forward.1} parent=1 // pred_region
      %s27 = ssub.s32 4096, 4096
      %28 = vsyncadd [#allocation3], %s27
      %s29 = sshll.u32 [#allocation2], 4
      %s30 = int_to_ptr.vmem [resolvable:$true] %s29
      %35 = dma.hbm_to_vmem [thread:$0]  %s5, 4096, %s30, [#allocation3], 256, 256, 16
    $region25: #{net_forward.1} parent=1 // pred_fallthru
      _
    // Predicated region
    $region26: #{net_forward.1} parent=1 // pred_check
      _
    $region27: #{net_forward.1} parent=1 // pred_check_branch
      %37 = sbr.rel (0) target = $region29
    $region28: #{net_forward.1} parent=1 // pred_region
      %s39 = ssub.s32 4096, 4096
      %40 = vsyncadd [#allocation5], %s39
      %s41 = sshll.u32 [#allocation4], 4
      %s42 = int_to_ptr.vmem [resolvable:$true] %s41
      %47 = dma.hbm_to_vmem [thread:$0]  %s6, 4096, %s42, [#allocation5], 128, 128, 8
    $region29: #{net_forward.1} parent=1 // pred_fallthru
      _
    // Predicated region
    $region30: #{net_forward.1} parent=1 // pred_check
      _
    $region31: #{net_forward.1} parent=1 // pred_check_branch
      %49 = sbr.rel (0) target = $region33
    $region32: #{net_forward.1} parent=1 // pred_region
      %50 = dma.done [#allocation3], 4096
    $region33: #{net_forward.1} parent=1 // pred_fallthru
      _
    // Predicated region
    $region34: #{net_forward.1} parent=1 // pred_check
      _
    $region35: #{net_forward.1} parent=1 // pred_check_branch
      %52 = sbr.rel (0) target = $region37
    $region36: #{net_forward.1} parent=1 // pred_region
      %53 = dma.done [#allocation5], 4096
    $region37: #{net_forward.1} parent=1 // pred_fallthru
      _
    %v55 = vld [vmem:[%s0] sm:$0xff]
    %v56 = vld [vmem:[%s0 + $0x8] sm:$0xff]
    %v57 = vld [vmem:[%s0 + $0x10] sm:$0xff]
    %v58 = vld [vmem:[%s0 + $0x18] sm:$0xff]
    %v59 = vld [vmem:[%s0 + $0x20] sm:$0xff]
    %v60 = vld [vmem:[%s0 + $0x28] sm:$0xff]
    %v61 = vld [vmem:[%s0 + $0x30] sm:$0xff]
    %v62 = vld [vmem:[%s0 + $0x38] sm:$0xff]
    %v63 = vld [vmem:[%s1] sm:$0x3]
    %v64 = vld [vmem:[%s2] sm:$0xf]
    %v65 = vld [vmem:[%s3] sm:$0x77]
    %vm66 = vcmask 89088
    %v67 = vsel %vm66, %v55, 0.0
    %v68 = vsel %vm66, %v56, 0.0
    %v69 = vadd.f32 %v67, %v68
    %v70 = vsel %vm66, %v57, 0.0
    %v71 = vadd.f32 %v69, %v70
    %v72 = vsel %vm66, %v58, 0.0
    %v73 = vadd.f32 %v71, %v72
    %v74 = vsel %vm66, %v59, 0.0
    %v75 = vadd.f32 %v73, %v74
    %v76 = vsel %vm66, %v60, 0.0
    %v77 = vadd.f32 %v75, %v76
    %v78 = vsel %vm66, %v61, 0.0
    %v79 = vadd.f32 %v77, %v78
    %v80 = vsel %vm66, %v62, 0.0
    %v81 = vadd.f32 %v79, %v80
    %v82 = vrot.slane %v81, 4
    %v83 = vadd.f32 %v81, %v82
    %v84 = vrot.slane %v83, 2
    %v85 = vadd.f32 %v83, %v84
    %v86 = vrot.slane %v85, 1
    %v87 = vadd.f32 %v85, %v86
    %v88 = vmul.f32 %v55, %v55
    %v89 = vmul.f32 %v56, %v56
    %v90 = vmul.f32 %v57, %v57
    %v91 = vmul.f32 %v58, %v58
    %v92 = vmul.f32 %v59, %v59
    %v93 = vmul.f32 %v60, %v60
    %v94 = vmul.f32 %v61, %v61
    %v95 = vmul.f32 %v62, %v62
    %v96 = vsel %vm66, %v88, 0.0
    %v97 = vsel %vm66, %v89, 0.0
    %v98 = vadd.f32 %v96, %v97
    %v99 = vsel %vm66, %v90, 0.0
    %v100 = vadd.f32 %v98, %v99
    %v101 = vsel %vm66, %v91, 0.0
    %v102 = vadd.f32 %v100, %v101
    %v103 = vsel %vm66, %v92, 0.0
    %v104 = vadd.f32 %v102, %v103
    %v105 = vsel %vm66, %v93, 0.0
    %v106 = vadd.f32 %v104, %v105
    %v107 = vsel %vm66, %v94, 0.0
    %v108 = vadd.f32 %v106, %v107
    %v109 = vsel %vm66, %v95, 0.0
    %v110 = vadd.f32 %v108, %v109
    %v111 = vrot.slane %v110, 4
    %v112 = vadd.f32 %v110, %v111
    %v113 = vrot.slane %v112, 2
    %v114 = vadd.f32 %v112, %v113
    %v115 = vrot.slane %v114, 1
    %v116 = vadd.f32 %v114, %v115
    %v117 = vmul.f32 %v87, 0.015625
    %v118 = vmul.f32 %v116, 0.015625
    %v119 = vmul.f32 %v117, %v117
    %v120 = vsub.f32 %v118, %v119
    %v121 = vmax.f32 %v120, 0.0
    %v122 = vld [vmem:[%s4] sm:$0xff]
    %v123 = vld [vmem:[%s4 + $0x8] sm:$0x7]
    %v124 = vadd.f32 %v121, 1e-05
    %v125 = vrsqrt.pop %v124
    %v126 = vmul.f32 %v63, %v125
    %v127 = vmul.f32 %v117, %v126
    %v129 = vrot.slane %v127, 7
    %v131 = vsub.f32 %v63, %v129
    %v133 = vrot.slane %v131, 1
    %v134 = vsel %vm66, %v133, 0
    %vm136 = vcmask 1042432
    %v138 = vsel %vm136, %v123, 0
    %140 = vmatprep.subr.mxu0 0.0
    %141 = vmatpush1.msra.mxu0 %v122
    %142 = vmatprep.subr.mxu0 0.0
    %143 = vmatpush1.msra.mxu0 %v138
    %144 = vmatprep.subr.mxu0 0.0
    %145 = vmatpush1.msra.mxu0 0.0
    %146 = vmatprep.subr.mxu0 0.0
    %147 = vmatpush1.msra.mxu0 0.0
    %148 = vmatprep.subr.mxu0 0.0
    %149 = vmatpush1.msra.mxu0 0.0
    %150 = vmatprep.subr.mxu0 0.0
    %151 = vmatpush1.msra.mxu0 0.0
    %152 = vmatprep.subr.mxu0 0.0
    %153 = vmatpush1.msra.mxu0 0.0
    %154 = vmatprep.subr.mxu0 0.0
    %155 = vmatpush1.msra.mxu0 0.0
    %156 = vmatprep.subr.mxu0 0.0
    %157 = vmatpush1.msra.mxu0 0.0
    %158 = vmatprep.subr.mxu0 0.0
    %159 = vmatpush1.msra.mxu0 0.0
    %160 = vmatprep.subr.mxu0 0.0
    %161 = vmatpush1.msra.mxu0 0.0
    %162 = vmatprep.subr.mxu0 0.0
    %163 = vmatpush1.msra.mxu0 0.0
    %164 = vmatprep.subr.mxu0 0.0
    %165 = vmatpush1.msra.mxu0 0.0
    %166 = vmatprep.subr.mxu0 0.0
    %167 = vmatpush1.msra.mxu0 0.0
    %168 = vmatprep.subr.mxu0 0.0
    %169 = vmatpush1.msra.mxu0 0.0
    %170 = vmatprep.subr.mxu0 0.0
    %171 = vmatpush1.msra.mxu0 0.0
    %172 = vmatprep.subr.mxu0 0.0
    %173 = vmatpush1.msra.mxu0 0.0
    %174 = vmatprep.subr.mxu0 0.0
    %175 = vmatpush1.msra.mxu0 0.0
    %176 = vmatprep.subr.mxu0 0.0
    %177 = vmatpush1.msra.mxu0 0.0
    %178 = vmatprep.subr.mxu0 0.0
    %179 = vmatpush1.msra.mxu0 0.0
    %180 = vmatprep.subr.mxu0 0.0
    %181 = vmatpush1.msra.mxu0 0.0
    %182 = vmatprep.subr.mxu0 0.0
    %183 = vmatpush1.msra.mxu0 0.0
    %184 = vmatprep.subr.mxu0 0.0
    %185 = vmatpush1.msra.mxu0 0.0
    %186 = vmatprep.subr.mxu0 0.0
    %187 = vmatpush1.msra.mxu0 0.0
    %188 = vmatprep.subr.mxu0 0.0
    %189 = vmatpush1.msra.mxu0 0.0
    %190 = vmatprep.subr.mxu0 0.0
    %191 = vmatpush1.msra.mxu0 0.0
    %192 = vmatprep.subr.mxu0 0.0
    %193 = vmatpush1.msra.mxu0 0.0
    %194 = vmatprep.subr.mxu0 0.0
    %195 = vmatpush1.msra.mxu0 0.0
    %196 = vmatprep.subr.mxu0 0.0
    %197 = vmatpush1.msra.mxu0 0.0
    %198 = vmatprep.subr.mxu0 0.0
    %199 = vmatpush1.msra.mxu0 0.0
    %200 = vmatprep.subr.mxu0 0.0
    %201 = vmatpush1.msra.mxu0 0.0
    %202 = vmatprep.subr.mxu0 0.0
    %203 = vmatpush1.msra.mxu0 0.0
    %204 = vmatprep.mubr.f32.mxu0 0.0
    %205 = vmatmul.mubr.f32.gmra.mrb[0].mxu0 %v134
    %v206 = vpop.f32.mrb[0].mxu0
    %v207 = vadd.f32 %v64, %v206
    %v208 = vpop.f32.mrb[0].mxu0
    %209 = vdwg.mxu0
    %v210 = vlaneseq
    %v211 = vshrl.u32 %v210, 7
    %v212 = vsub.s32 0, %v211
    %v213 = vrot.slane %v126, %v212
    %v214 = vmul.f32 %v55, %v213
    %v215 = vmul.f32 %v56, %v213
    %v216 = vmul.f32 %v57, %v213
    %v217 = vmul.f32 %v58, %v213
    %v218 = vmul.f32 %v59, %v213
    %v219 = vmul.f32 %v60, %v213
    %v220 = vmul.f32 %v61, %v213
    %v221 = vmul.f32 %v62, %v213
    %v222 = vpack.c.bf16 %v215, %v214
    %v223 = vpack.c.bf16 %v217, %v216
    %v224 = vpack.c.bf16 %v219, %v218
    %v225 = vpack.c.bf16 %v221, %v220
    %v226 = vpack.c.bf16 %v123, %v122
    %v227 = vlaneseq
    %v228 = vshrl.u32 %v227, 7
    %v229 = vsub.s32 0, %v228
    %v230 = vrot.slane %v207, %v229
    %v232 = vsel %vm66, %v222, 0
    %v235 = vsel %vm66, %v223, 0
    %v238 = vsel %vm66, %v224, 0
    %v241 = vsel %vm66, %v225, 0
    %vm243 = vcmask 1044480
    %vm244 = vcmask 1045504
    %v245 = vsel %vm243, 4294967295, 65535
    %v246 = vsel %vm244, %v245, 0
    %v248 = vand.u32 %v226, %v246
    %250 = vmatprep.subr.bf16.mxu0 0
    %251 = vmatpush1.bf16.msra.mxu0 %v248
    %252 = vmatprep.subr.bf16.mxu0 0
    %253 = vmatpush1.bf16.msra.mxu0 0
    %254 = vmatprep.subr.bf16.mxu0 0
    %255 = vmatpush1.bf16.msra.mxu0 0
    %256 = vmatprep.subr.bf16.mxu0 0
    %257 = vmatpush1.bf16.msra.mxu0 0
    %258 = vmatprep.subr.bf16.mxu0 0
    %259 = vmatpush1.bf16.msra.mxu0 0
    %260 = vmatprep.subr.bf16.mxu0 0
    %261 = vmatpush1.bf16.msra.mxu0 0
    %262 = vmatprep.subr.bf16.mxu0 0
    %263 = vmatpush1.bf16.msra.mxu0 0
    %264 = vmatprep.subr.bf16.mxu0 0
    %265 = vmatpush1.bf16.msra.mxu0 0
    %266 = vmatprep.subr.bf16.mxu0 0
    %267 = vmatpush1.bf16.msra.mxu0 0
    %268 = vmatprep.subr.bf16.mxu0 0
    %269 = vmatpush1.bf16.msra.mxu0 0
    %270 = vmatprep.subr.bf16.mxu0 0
    %271 = vmatpush1.bf16.msra.mxu0 0
    %272 = vmatprep.subr.bf16.mxu0 0
    %273 = vmatpush1.bf16.msra.mxu0 0
    %274 = vmatprep.subr.bf16.mxu0 0
    %275 = vmatpush1.bf16.msra.mxu0 0
    %276 = vmatprep.subr.bf16.mxu0 0
    %277 = vmatpush1.bf16.msra.mxu0 0
    %278 = vmatprep.subr.bf16.mxu0 0
    %279 = vmatpush1.bf16.msra.mxu0 0
    %280 = vmatprep.subr.bf16.mxu0 0
    %281 = vmatpush1.bf16.msra.mxu0 0
    %282 = vmatprep.mubr.bf16.mxu0 0
    %283 = vmatmul.mubr.bf16.gmra.mrb[0].mxu0 %v232
    %v284 = vpop.f32.mrb[0].mxu0
    %v285 = vadd.f32 %v230, %v284
    %v286 = vpop.f32.mrb[0].mxu0
    %v287 = vpop.f32.mrb[0].mxu0
    %v288 = vadd.f32 %v230, %v287
    %v289 = vpop.f32.mrb[0].mxu0
    %290 = vmatprep.mubr.bf16.mxu0 0
    %291 = vmatmul.mubr.bf16.gmra.mrb[0].mxu0 %v235
    %v292 = vpop.f32.mrb[0].mxu0
    %v293 = vadd.f32 %v230, %v292
    %v294 = vpop.f32.mrb[0].mxu0
    %v295 = vpop.f32.mrb[0].mxu0
    %v296 = vadd.f32 %v230, %v295
    %v297 = vpop.f32.mrb[0].mxu0
    %298 = vmatprep.mubr.bf16.mxu0 0
    %299 = vmatmul.mubr.bf16.gmra.mrb[0].mxu0 %v238
    %v300 = vpop.f32.mrb[0].mxu0
    %v301 = vadd.f32 %v230, %v300
    %v302 = vpop.f32.mrb[0].mxu0
    %v303 = vpop.f32.mrb[0].mxu0
    %v304 = vadd.f32 %v230, %v303
    %v305 = vpop.f32.mrb[0].mxu0
    %306 = vmatprep.mubr.bf16.mxu0 0
    %307 = vmatmul.mubr.bf16.gmra.mrb[0].mxu0 %v241
    %v308 = vpop.f32.mrb[0].mxu0
    %v309 = vadd.f32 %v230, %v308
    %v310 = vpop.f32.mrb[0].mxu0
    %v311 = vpop.f32.mrb[0].mxu0
    %v312 = vadd.f32 %v230, %v311
    %v313 = vpop.f32.mrb[0].mxu0
    %314 = vdwg.mxu0
    %vm315 = vcmp.ge.f32.partialorder %v285, 0.0
    %vm316 = vcmp.ge.f32.partialorder %v288, 0.0
    %vm317 = vcmp.ge.f32.partialorder %v293, 0.0
    %vm318 = vcmp.ge.f32.partialorder %v296, 0.0
    %vm319 = vcmp.ge.f32.partialorder %v301, 0.0
    %vm320 = vcmp.ge.f32.partialorder %v304, 0.0
    %vm321 = vcmp.ge.f32.partialorder %v309, 0.0
    %vm322 = vcmp.ge.f32.partialorder %v312, 0.0
    %v323 = vmul.f32 %v285, 0.01
    %v324 = vmul.f32 %v288, 0.01
    %v325 = vmul.f32 %v293, 0.01
    %v326 = vmul.f32 %v296, 0.01
    %v327 = vmul.f32 %v301, 0.01
    %v328 = vmul.f32 %v304, 0.01
    %v329 = vmul.f32 %v309, 0.01
    %v330 = vmul.f32 %v312, 0.01
    %v331 = vsel %vm315, %v285, %v323
    %v332 = vsel %vm316, %v288, %v324
    %v333 = vsel %vm317, %v293, %v325
    %v334 = vsel %vm318, %v296, %v326
    %v335 = vsel %vm319, %v301, %v327
    %v336 = vsel %vm320, %v304, %v328
    %v337 = vsel %vm321, %v309, %v329
    %v338 = vsel %vm322, %v312, %v330
    %v339 = vadd.f32 %v331, %v332
    %v340 = vadd.f32 %v339, %v333
    %v341 = vadd.f32 %v340, %v334
    %v342 = vadd.f32 %v341, %v335
    %v343 = vadd.f32 %v342, %v336
    %v344 = vadd.f32 %v343, %v337
    %v345 = vadd.f32 %v344, %v338
    %v346 = vrot.slane %v345, 4
    %v347 = vadd.f32 %v345, %v346
    %v348 = vrot.slane %v347, 2
    %v349 = vadd.f32 %v347, %v348
    %v350 = vrot.slane %v349, 1
    %v351 = vadd.f32 %v349, %v350
    %v352 = vmul.f32 %v331, %v331
    %v353 = vmul.f32 %v332, %v332
    %v354 = vmul.f32 %v333, %v333
    %v355 = vmul.f32 %v334, %v334
    %v356 = vmul.f32 %v335, %v335
    %v357 = vmul.f32 %v336, %v336
    %v358 = vmul.f32 %v337, %v337
    %v359 = vmul.f32 %v338, %v338
    %v360 = vadd.f32 %v352, %v353
    %v361 = vadd.f32 %v360, %v354
    %v362 = vadd.f32 %v361, %v355
    %v363 = vadd.f32 %v362, %v356
    %v364 = vadd.f32 %v363, %v357
    %v365 = vadd.f32 %v364, %v358
    %v366 = vadd.f32 %v365, %v359
    %v367 = vrot.slane %v366, 4
    %v368 = vadd.f32 %v366, %v367
    %v369 = vrot.slane %v368, 2
    %v370 = vadd.f32 %v368, %v369
    %v371 = vrot.slane %v370, 1
    %v372 = vadd.f32 %v370, %v371
    %v373 = vmul.f32 %v351, 0.015625
    %v374 = vmul.f32 %v372, 0.015625
    %v375 = vmul.f32 %v373, %v373
    %v376 = vsub.f32 %v374, %v375
    %v377 = vmax.f32 %v376, 0.0
    %v378 = vld [vmem:[#allocation2] sm:$0xff]
    %v379 = vld [vmem:[#allocation2 + $0x8] sm:$0xff]
    %v380 = vld [vmem:[#allocation2 + $0x10] sm:$0xff]
    %v381 = vld [vmem:[#allocation2 + $0x18] sm:$0xff]
    %v382 = vld [vmem:[#allocation2 + $0x20] sm:$0xff]
    %v383 = vld [vmem:[#allocation2 + $0x28] sm:$0xff]
    %v384 = vld [vmem:[#allocation2 + $0x30] sm:$0xff]
    %v385 = vld [vmem:[#allocation2 + $0x38] sm:$0xff]
    %v386 = vld [vmem:[#allocation2 + $0x40] sm:$0xff]
    %v387 = vld [vmem:[#allocation2 + $0x48] sm:$0xff]
    %v388 = vld [vmem:[#allocation2 + $0x50] sm:$0xff]
    %v389 = vld [vmem:[#allocation2 + $0x58] sm:$0xff]
    %v390 = vld [vmem:[#allocation2 + $0x60] sm:$0xff]
    %v391 = vld [vmem:[#allocation2 + $0x68] sm:$0xff]
    %v392 = vld [vmem:[#allocation2 + $0x70] sm:$0xff]
    %v393 = vld [vmem:[#allocation2 + $0x78] sm:$0xff]
    %v394 = vld [vmem:[#allocation2 + $0x80] sm:$0xff]
    %v395 = vld [vmem:[#allocation2 + $0x88] sm:$0xff]
    %v396 = vld [vmem:[#allocation2 + $0x90] sm:$0xff]
    %v397 = vld [vmem:[#allocation2 + $0x98] sm:$0xff]
    %v398 = vld [vmem:[#allocation2 + $0xa0] sm:$0xff]
    %v399 = vld [vmem:[#allocation2 + $0xa8] sm:$0xff]
    %v400 = vld [vmem:[#allocation2 + $0xb0] sm:$0xff]
    %v401 = vld [vmem:[#allocation2 + $0xb8] sm:$0xff]
    %v402 = vld [vmem:[#allocation2 + $0xc0] sm:$0xff]
    %v403 = vld [vmem:[#allocation2 + $0xc8] sm:$0xff]
    %v404 = vld [vmem:[#allocation2 + $0xd0] sm:$0xff]
    %v405 = vld [vmem:[#allocation2 + $0xd8] sm:$0xff]
    %v406 = vld [vmem:[#allocation2 + $0xe0] sm:$0xff]
    %v407 = vld [vmem:[#allocation2 + $0xe8] sm:$0xff]
    %v408 = vld [vmem:[#allocation2 + $0xf0] sm:$0xff]
    %v409 = vld [vmem:[#allocation2 + $0xf8] sm:$0xff]
    %v410 = vadd.f32 %v377, 1e-05
    %v411 = vrsqrt.pop %v410
    %v412 = vmul.f32 %v64, %v411
    %v413 = vmul.f32 %v373, %v412
    %v415 = vrot.slane %v413, 7
    %v417 = vsub.f32 %v64, %v415
    %v419 = vrot.slane %v417, 2
    %v422 = vlaneseq
    %v423 = vshrl.u32 %v422, 7
    %v424 = vsub.s32 0, %v423
    %v425 = vrot.slane %v65, %v424
    %v426 = vlaneseq
    %v427 = vshrl.u32 %v426, 7
    %v428 = vsub.s32 4, %v427
    %v429 = vrot.slane %v65, %v428
    %432 = vmatprep.subr.mxu0 %v379
    %433 = vmatpush1.msra.mxu0 %v378
    %434 = vmatprep.subr.mxu0 %v381
    %435 = vmatpush1.msra.mxu0 %v380
    %436 = vmatprep.subr.mxu0 %v383
    %437 = vmatpush1.msra.mxu0 %v382
    %438 = vmatprep.subr.mxu0 %v385
    %439 = vmatpush1.msra.mxu0 %v384
    %440 = vmatprep.subr.mxu0 %v387
    %441 = vmatpush1.msra.mxu0 %v386
    %442 = vmatprep.subr.mxu0 %v389
    %443 = vmatpush1.msra.mxu0 %v388
    %444 = vmatprep.subr.mxu0 %v391
    %445 = vmatpush1.msra.mxu0 %v390
    %446 = vmatprep.subr.mxu0 %v393
    %447 = vmatpush1.msra.mxu0 %v392
    %448 = vmatprep.subr.mxu0 %v395
    %449 = vmatpush1.msra.mxu0 %v394
    %450 = vmatprep.subr.mxu0 %v397
    %451 = vmatpush1.msra.mxu0 %v396
    %452 = vmatprep.subr.mxu0 %v399
    %453 = vmatpush1.msra.mxu0 %v398
    %454 = vmatprep.subr.mxu0 %v401
    %455 = vmatpush1.msra.mxu0 %v400
    %456 = vmatprep.subr.mxu0 %v403
    %457 = vmatpush1.msra.mxu0 %v402
    %458 = vmatprep.subr.mxu0 %v405
    %459 = vmatpush1.msra.mxu0 %v404
    %460 = vmatprep.subr.mxu0 %v407
    %461 = vmatpush1.msra.mxu0 %v406
    %462 = vmatprep.subr.mxu0 %v409
    %463 = vmatpush1.msra.mxu0 %v408
    %464 = vmatprep.subr.mxu0 0.0
    %465 = vmatpush1.msra.mxu0 0.0
    %466 = vmatprep.subr.mxu0 0.0
    %467 = vmatpush1.msra.mxu0 0.0
    %468 = vmatprep.subr.mxu0 0.0
    %469 = vmatpush1.msra.mxu0 0.0
    %470 = vmatprep.subr.mxu0 0.0
    %471 = vmatpush1.msra.mxu0 0.0
    %472 = vmatprep.subr.mxu0 0.0
    %473 = vmatpush1.msra.mxu0 0.0
    %474 = vmatprep.subr.mxu0 0.0
    %475 = vmatpush1.msra.mxu0 0.0
    %476 = vmatprep.subr.mxu0 0.0
    %477 = vmatpush1.msra.mxu0 0.0
    %478 = vmatprep.subr.mxu0 0.0
    %479 = vmatpush1.msra.mxu0 0.0
    %480 = vmatprep.subr.mxu0 0.0
    %481 = vmatpush1.msra.mxu0 0.0
    %482 = vmatprep.subr.mxu0 0.0
    %483 = vmatpush1.msra.mxu0 0.0
    %484 = vmatprep.subr.mxu0 0.0
    %485 = vmatpush1.msra.mxu0 0.0
    %486 = vmatprep.subr.mxu0 0.0
    %487 = vmatpush1.msra.mxu0 0.0
    %488 = vmatprep.subr.mxu0 0.0
    %489 = vmatpush1.msra.mxu0 0.0
    %490 = vmatprep.subr.mxu0 0.0
    %491 = vmatpush1.msra.mxu0 0.0
    %492 = vmatprep.subr.mxu0 0.0
    %493 = vmatpush1.msra.mxu0 0.0
    %494 = vmatprep.subr.mxu0 0.0
    %495 = vmatpush1.msra.mxu0 0.0
    %496 = vmatprep.mubr.f32.mxu0 0.0
    %497 = vmatmul.mubr.f32.gmra.mrb[0].mxu0 %v419
    %v498 = vpop.f32.mrb[0].mxu0
    %v499 = vadd.f32 %v425, %v498
    %v500 = vpop.f32.mrb[0].mxu0
    %v501 = vadd.f32 %v429, %v500
    %502 = vdwg.mxu0
    %v503 = vlaneseq
    %v504 = vshrl.u32 %v503, 7
    %v505 = vsub.s32 1, %v504
    %v506 = vrot.slane %v412, %v505
    %v507 = vmul.f32 %v331, %v506
    %v508 = vmul.f32 %v332, %v506
    %v509 = vmul.f32 %v333, %v506
    %v510 = vmul.f32 %v334, %v506
    %v511 = vmul.f32 %v335, %v506
    %v512 = vmul.f32 %v336, %v506
    %v513 = vmul.f32 %v337, %v506
    %v514 = vmul.f32 %v338, %v506
    %v515 = vpack.c.bf16 %v508, %v507
    %v516 = vpack.c.bf16 %v510, %v509
    %v517 = vpack.c.bf16 %v512, %v511
    %v518 = vpack.c.bf16 %v514, %v513
    %v519 = vpack.c.bf16 %v380, %v378
    %v520 = vpack.c.bf16 %v381, %v379
    %v521 = vpack.c.bf16 %v384, %v382
    %v522 = vpack.c.bf16 %v385, %v383
    %v523 = vpack.c.bf16 %v388, %v386
    %v524 = vpack.c.bf16 %v389, %v387
    %v525 = vpack.c.bf16 %v392, %v390
    %v526 = vpack.c.bf16 %v393, %v391
    %v527 = vpack.c.bf16 %v396, %v394
    %v528 = vpack.c.bf16 %v397, %v395
    %v529 = vpack.c.bf16 %v400, %v398
    %v530 = vpack.c.bf16 %v401, %v399
    %v531 = vpack.c.bf16 %v404, %v402
    %v532 = vpack.c.bf16 %v405, %v403
    %v533 = vpack.c.bf16 %v408, %v406
    %v534 = vpack.c.bf16 %v409, %v407
    %v535 = vlaneseq
    %v536 = vshrl.u32 %v535, 7
    %v537 = vsub.s32 0, %v536
    %v538 = vrot.slane %v499, %v537
    %v539 = vlaneseq
    %v540 = vshrl.u32 %v539, 7
    %v541 = vsub.s32 0, %v540
    %v542 = vrot.slane %v501, %v541
    %543 = vmatprep.subr.bf16.mxu0 %v520
    %544 = vmatpush1.bf16.msra.mxu0 %v519
    %545 = vmatprep.subr.bf16.mxu0 %v522
    %546 = vmatpush1.bf16.msra.mxu0 %v521
    %547 = vmatprep.subr.bf16.mxu0 %v524
    %548 = vmatpush1.bf16.msra.mxu0 %v523
    %549 = vmatprep.subr.bf16.mxu0 %v526
    %550 = vmatpush1.bf16.msra.mxu0 %v525
    %551 = vmatprep.subr.bf16.mxu0 %v528
    %552 = vmatpush1.bf16.msra.mxu0 %v527
    %553 = vmatprep.subr.bf16.mxu0 %v530
    %554 = vmatpush1.bf16.msra.mxu0 %v529
    %555 = vmatprep.subr.bf16.mxu0 %v532
    %556 = vmatpush1.bf16.msra.mxu0 %v531
    %557 = vmatprep.subr.bf16.mxu0 %v534
    %558 = vmatpush1.bf16.msra.mxu0 %v533
    %559 = vmatprep.subr.bf16.mxu0 0
    %560 = vmatpush1.bf16.msra.mxu0 0
    %561 = vmatprep.subr.bf16.mxu0 0
    %562 = vmatpush1.bf16.msra.mxu0 0
    %563 = vmatprep.subr.bf16.mxu0 0
    %564 = vmatpush1.bf16.msra.mxu0 0
    %565 = vmatprep.subr.bf16.mxu0 0
    %566 = vmatpush1.bf16.msra.mxu0 0
    %567 = vmatprep.subr.bf16.mxu0 0
    %568 = vmatpush1.bf16.msra.mxu0 0
    %569 = vmatprep.subr.bf16.mxu0 0
    %570 = vmatpush1.bf16.msra.mxu0 0
    %571 = vmatprep.subr.bf16.mxu0 0
    %572 = vmatpush1.bf16.msra.mxu0 0
    %573 = vmatprep.subr.bf16.mxu0 0
    %574 = vmatpush1.bf16.msra.mxu0 0
    %575 = vmatprep.mubr.bf16.mxu0 0
    %576 = vmatmul.mubr.bf16.gmra.mrb[0].mxu0 %v515
    %v577 = vpop.f32.mrb[0].mxu0
    %v578 = vadd.f32 %v538, %v577
    %v579 = vpop.f32.mrb[0].mxu0
    %v580 = vadd.f32 %v542, %v579
    %v581 = vpop.f32.mrb[0].mxu0
    %v582 = vadd.f32 %v538, %v581
    %v583 = vpop.f32.mrb[0].mxu0
    %v584 = vadd.f32 %v542, %v583
    %585 = vmatprep.mubr.bf16.mxu0 0
    %586 = vmatmul.mubr.bf16.gmra.mrb[0].mxu0 %v516
    %v587 = vpop.f32.mrb[0].mxu0
    %v588 = vadd.f32 %v538, %v587
    %v589 = vpop.f32.mrb[0].mxu0
    %v590 = vadd.f32 %v542, %v589
    %v591 = vpop.f32.mrb[0].mxu0
    %v592 = vadd.f32 %v538, %v591
    %v593 = vpop.f32.mrb[0].mxu0
    %v594 = vadd.f32 %v542, %v593
    %595 = vmatprep.mubr.bf16.mxu0 0
    %596 = vmatmul.mubr.bf16.gmra.mrb[0].mxu0 %v517
    %v597 = vpop.f32.mrb[0].mxu0
    %v598 = vadd.f32 %v538, %v597
    %v599 = vpop.f32.mrb[0].mxu0
    %v600 = vadd.f32 %v542, %v599
    %v601 = vpop.f32.mrb[0].mxu0
    %v602 = vadd.f32 %v538, %v601
    %v603 = vpop.f32.mrb[0].mxu0
    %v604 = vadd.f32 %v542, %v603
    %605 = vmatprep.mubr.bf16.mxu0 0
    %606 = vmatmul.mubr.bf16.gmra.mrb[0].mxu0 %v518
    %v607 = vpop.f32.mrb[0].mxu0
    %v608 = vadd.f32 %v538, %v607
    %v609 = vpop.f32.mrb[0].mxu0
    %v610 = vadd.f32 %v542, %v609
    %v611 = vpop.f32.mrb[0].mxu0
    %v612 = vadd.f32 %v538, %v611
    %v613 = vpop.f32.mrb[0].mxu0
    %v614 = vadd.f32 %v542, %v613
    %615 = vdwg.mxu0
    %vm616 = vcmp.ge.f32.partialorder %v578, 0.0
    %vm617 = vcmp.ge.f32.partialorder %v580, 0.0
    %vm618 = vcmp.ge.f32.partialorder %v582, 0.0
    %vm619 = vcmp.ge.f32.partialorder %v584, 0.0
    %vm620 = vcmp.ge.f32.partialorder %v588, 0.0
    %vm621 = vcmp.ge.f32.partialorder %v590, 0.0
    %vm622 = vcmp.ge.f32.partialorder %v592, 0.0
    %vm623 = vcmp.ge.f32.partialorder %v594, 0.0
    %vm624 = vcmp.ge.f32.partialorder %v598, 0.0
    %vm625 = vcmp.ge.f32.partialorder %v600, 0.0
    %vm626 = vcmp.ge.f32.partialorder %v602, 0.0
    %vm627 = vcmp.ge.f32.partialorder %v604, 0.0
    %vm628 = vcmp.ge.f32.partialorder %v608, 0.0
    %vm629 = vcmp.ge.f32.partialorder %v610, 0.0
    %vm630 = vcmp.ge.f32.partialorder %v612, 0.0
    %vm631 = vcmp.ge.f32.partialorder %v614, 0.0
    %v632 = vmul.f32 %v578, 0.01
    %v633 = vmul.f32 %v580, 0.01
    %v634 = vmul.f32 %v582, 0.01
    %v635 = vmul.f32 %v584, 0.01
    %v636 = vmul.f32 %v588, 0.01
    %v637 = vmul.f32 %v590, 0.01
    %v638 = vmul.f32 %v592, 0.01
    %v639 = vmul.f32 %v594, 0.01
    %v640 = vmul.f32 %v598, 0.01
    %v641 = vmul.f32 %v600, 0.01
    %v642 = vmul.f32 %v602, 0.01
    %v643 = vmul.f32 %v604, 0.01
    %v644 = vmul.f32 %v608, 0.01
    %v645 = vmul.f32 %v610, 0.01
    %v646 = vmul.f32 %v612, 0.01
    %v647 = vmul.f32 %v614, 0.01
    %v648 = vsel %vm616, %v578, %v632
    %v649 = vsel %vm617, %v580, %v633
    %v650 = vsel %vm618, %v582, %v634
    %v651 = vsel %vm619, %v584, %v635
    %v652 = vsel %vm620, %v588, %v636
    %v653 = vsel %vm621, %v590, %v637
    %v654 = vsel %vm622, %v592, %v638
    %v655 = vsel %vm623, %v594, %v639
    %v656 = vsel %vm624, %v598, %v640
    %v657 = vsel %vm625, %v600, %v641
    %v658 = vsel %vm626, %v602, %v642
    %v659 = vsel %vm627, %v604, %v643
    %v660 = vsel %vm628, %v608, %v644
    %v661 = vsel %vm629, %v610, %v645
    %v662 = vsel %vm630, %v612, %v646
    %v663 = vsel %vm631, %v614, %v647
    %v664 = vadd.f32 %v648, %v650
    %v665 = vadd.f32 %v664, %v652
    %v666 = vadd.f32 %v665, %v654
    %v667 = vadd.f32 %v666, %v656
    %v668 = vadd.f32 %v667, %v658
    %v669 = vadd.f32 %v668, %v660
    %v670 = vadd.f32 %v669, %v662
    %v671 = vrot.slane %v670, 4
    %v672 = vadd.f32 %v670, %v671
    %v673 = vrot.slane %v672, 2
    %v674 = vadd.f32 %v672, %v673
    %v675 = vrot.slane %v674, 1
    %v676 = vadd.f32 %v674, %v675
    %v677 = vadd.f32 %v649, %v651
    %v678 = vadd.f32 %v677, %v653
    %v679 = vadd.f32 %v678, %v655
    %v680 = vadd.f32 %v679, %v657
    %v681 = vadd.f32 %v680, %v659
    %v682 = vadd.f32 %v681, %v661
    %v683 = vadd.f32 %v682, %v663
    %v684 = vrot.slane %v683, 4
    %v685 = vadd.f32 %v683, %v684
    %v686 = vrot.slane %v685, 2
    %v687 = vadd.f32 %v685, %v686
    %v688 = vrot.slane %v687, 1
    %v689 = vadd.f32 %v687, %v688
    %v690 = vmul.f32 %v648, %v648
    %v691 = vmul.f32 %v649, %v649
    %v692 = vmul.f32 %v650, %v650
    %v693 = vmul.f32 %v651, %v651
    %v694 = vmul.f32 %v652, %v652
    %v695 = vmul.f32 %v653, %v653
    %v696 = vmul.f32 %v654, %v654
    %v697 = vmul.f32 %v655, %v655
    %v698 = vmul.f32 %v656, %v656
    %v699 = vmul.f32 %v657, %v657
    %v700 = vmul.f32 %v658, %v658
    %v701 = vmul.f32 %v659, %v659
    %v702 = vmul.f32 %v660, %v660
    %v703 = vmul.f32 %v661, %v661
    %v704 = vmul.f32 %v662, %v662
    %v705 = vmul.f32 %v663, %v663
    %v706 = vadd.f32 %v690, %v692
    %v707 = vadd.f32 %v706, %v694
    %v708 = vadd.f32 %v707, %v696
    %v709 = vadd.f32 %v708, %v698
    %v710 = vadd.f32 %v709, %v700
    %v711 = vadd.f32 %v710, %v702
    %v712 = vadd.f32 %v711, %v704
    %v713 = vrot.slane %v712, 4
    %v714 = vadd.f32 %v712, %v713
    %v715 = vrot.slane %v714, 2
    %v716 = vadd.f32 %v714, %v715
    %v717 = vrot.slane %v716, 1
    %v718 = vadd.f32 %v716, %v717
    %v719 = vadd.f32 %v691, %v693
    %v720 = vadd.f32 %v719, %v695
    %v721 = vadd.f32 %v720, %v697
    %v722 = vadd.f32 %v721, %v699
    %v723 = vadd.f32 %v722, %v701
    %v724 = vadd.f32 %v723, %v703
    %v725 = vadd.f32 %v724, %v705
    %v726 = vrot.slane %v725, 4
    %v727 = vadd.f32 %v725, %v726
    %v728 = vrot.slane %v727, 2
    %v729 = vadd.f32 %v727, %v728
    %v730 = vrot.slane %v729, 1
    %v731 = vadd.f32 %v729, %v730
    %v732 = vmul.f32 %v676, 0.015625
    %v733 = vmul.f32 %v689, 0.015625
    %v734 = vmul.f32 %v718, 0.015625
    %v735 = vmul.f32 %v731, 0.015625
    %v736 = vmul.f32 %v732, %v732
    %v737 = vmul.f32 %v733, %v733
    %v738 = vsub.f32 %v734, %v736
    %v739 = vsub.f32 %v735, %v737
    %v740 = vmax.f32 %v738, 0.0
    %v741 = vmax.f32 %v739, 0.0
    %v742 = vld [vmem:[#allocation4] sm:$0xff]
    %v743 = vld [vmem:[#allocation4 + $0x8] sm:$0xff]
    %v744 = vld [vmem:[#allocation4 + $0x10] sm:$0xff]
    %v745 = vld [vmem:[#allocation4 + $0x18] sm:$0xff]
    %v746 = vld [vmem:[#allocation4 + $0x20] sm:$0xff]
    %v747 = vld [vmem:[#allocation4 + $0x28] sm:$0xff]
    %v748 = vld [vmem:[#allocation4 + $0x30] sm:$0xff]
    %v749 = vld [vmem:[#allocation4 + $0x38] sm:$0xff]
    %v750 = vld [vmem:[#allocation4 + $0x40] sm:$0xff]
    %v751 = vld [vmem:[#allocation4 + $0x48] sm:$0xff]
    %v752 = vld [vmem:[#allocation4 + $0x50] sm:$0xff]
    %v753 = vld [vmem:[#allocation4 + $0x58] sm:$0xff]
    %v754 = vld [vmem:[#allocation4 + $0x60] sm:$0xff]
    %v755 = vld [vmem:[#allocation4 + $0x68] sm:$0xff]
    %v756 = vld [vmem:[#allocation4 + $0x70] sm:$0xff]
    %v757 = vld [vmem:[#allocation4 + $0x78] sm:$0xff]
    %v758 = vld [vmem:[#allocation4 + $0x80] sm:$0xff]
    %v759 = vld [vmem:[#allocation4 + $0x88] sm:$0xff]
    %v760 = vld [vmem:[#allocation4 + $0x90] sm:$0xff]
    %v761 = vld [vmem:[#allocation4 + $0x98] sm:$0xff]
    %v762 = vld [vmem:[#allocation4 + $0xa0] sm:$0xff]
    %v763 = vld [vmem:[#allocation4 + $0xa8] sm:$0xff]
    %v764 = vld [vmem:[#allocation4 + $0xb0] sm:$0xff]
    %v765 = vld [vmem:[#allocation4 + $0xb8] sm:$0xff]
    %v766 = vld [vmem:[#allocation4 + $0xc0] sm:$0xff]
    %v767 = vld [vmem:[#allocation4 + $0xc8] sm:$0xff]
    %v768 = vld [vmem:[#allocation4 + $0xd0] sm:$0xff]
    %v769 = vld [vmem:[#allocation4 + $0xd8] sm:$0xff]
    %v770 = vld [vmem:[#allocation4 + $0xe0] sm:$0xff]
    %v771 = vld [vmem:[#allocation4 + $0xe8] sm:$0xff]
    %v772 = vld [vmem:[#allocation4 + $0xf0] sm:$0xff]
    %v773 = vld [vmem:[#allocation4 + $0xf8] sm:$0xff]
    %v774 = vadd.f32 %v740, 1e-05
    %v775 = vadd.f32 %v741, 1e-05
    %v776 = vrsqrt.pop %v774
    %v777 = vrsqrt.pop %v775
    %v780 = vcombine.low %v776, %v777
    %v781 = vrot.slane %v780, 7
    %v783 = vmul.f32 %v65, %v781
    %v785 = vlaneseq
    %v786 = vshrl.u32 %v785, 7
    %v787 = vsub.s32 1, %v786
    %v788 = vrot.slane %v783, %v787
    %v789 = vlaneseq
    %v790 = vshrl.u32 %v789, 7
    %v791 = vsub.s32 5, %v790
    %v792 = vrot.slane %v783, %v791
    %v795 = vmul.f32 %v732, %v788
    %v796 = vmul.f32 %v733, %v792
    %v799 = vcombine.low %v795, %v796
    %v800 = vrot.slane %v799, 6
    %v802 = vsub.f32 %v65, %v800
    %v804 = vlaneseq
    %v805 = vshrl.u32 %v804, 7
    %v806 = vsub.s32 2, %v805
    %v807 = vrot.slane %v802, %v806
    %v808 = vlaneseq
    %v809 = vshrl.u32 %v808, 7
    %v810 = vsub.s32 6, %v809
    %v811 = vrot.slane %v802, %v810
    %v815 = vrot.slane %v64, 3
    %817 = vmatprep.subr.mxu0 0.0
    %818 = vmatpush1.msra.mxu0 %v742
    %819 = vmatprep.subr.mxu0 0.0
    %820 = vmatpush1.msra.mxu0 %v743
    %821 = vmatprep.subr.mxu0 0.0
    %822 = vmatpush1.msra.mxu0 %v744
    %823 = vmatprep.subr.mxu0 0.0
    %824 = vmatpush1.msra.mxu0 %v745
    %825 = vmatprep.subr.mxu0 0.0
    %826 = vmatpush1.msra.mxu0 %v746
    %827 = vmatprep.subr.mxu0 0.0
    %828 = vmatpush1.msra.mxu0 %v747
    %829 = vmatprep.subr.mxu0 0.0
    %830 = vmatpush1.msra.mxu0 %v748
    %831 = vmatprep.subr.mxu0 0.0
    %832 = vmatpush1.msra.mxu0 %v749
    %833 = vmatprep.subr.mxu0 0.0
    %834 = vmatpush1.msra.mxu0 %v750
    %835 = vmatprep.subr.mxu0 0.0
    %836 = vmatpush1.msra.mxu0 %v751
    %837 = vmatprep.subr.mxu0 0.0
    %838 = vmatpush1.msra.mxu0 %v752
    %839 = vmatprep.subr.mxu0 0.0
    %840 = vmatpush1.msra.mxu0 %v753
    %841 = vmatprep.subr.mxu0 0.0
    %842 = vmatpush1.msra.mxu0 %v754
    %843 = vmatprep.subr.mxu0 0.0
    %844 = vmatpush1.msra.mxu0 %v755
    %845 = vmatprep.subr.mxu0 0.0
    %846 = vmatpush1.msra.mxu0 %v756
    %847 = vmatprep.subr.mxu0 0.0
    %848 = vmatpush1.msra.mxu0 %v757
    %849 = vmatprep.subr.mxu0 0.0
    %850 = vmatpush1.msra.mxu0 %v758
    %851 = vmatprep.subr.mxu0 0.0
    %852 = vmatpush1.msra.mxu0 %v759
    %853 = vmatprep.subr.mxu0 0.0
    %854 = vmatpush1.msra.mxu0 %v760
    %855 = vmatprep.subr.mxu0 0.0
    %856 = vmatpush1.msra.mxu0 %v761
    %857 = vmatprep.subr.mxu0 0.0
    %858 = vmatpush1.msra.mxu0 %v762
    %859 = vmatprep.subr.mxu0 0.0
    %860 = vmatpush1.msra.mxu0 %v763
    %861 = vmatprep.subr.mxu0 0.0
    %862 = vmatpush1.msra.mxu0 %v764
    %863 = vmatprep.subr.mxu0 0.0
    %864 = vmatpush1.msra.mxu0 %v765
    %865 = vmatprep.subr.mxu0 0.0
    %866 = vmatpush1.msra.mxu0 %v766
    %867 = vmatprep.subr.mxu0 0.0
    %868 = vmatpush1.msra.mxu0 %v767
    %869 = vmatprep.subr.mxu0 0.0
    %870 = vmatpush1.msra.mxu0 %v768
    %871 = vmatprep.subr.mxu0 0.0
    %872 = vmatpush1.msra.mxu0 %v769
    %873 = vmatprep.subr.mxu0 0.0
    %874 = vmatpush1.msra.mxu0 %v770
    %875 = vmatprep.subr.mxu0 0.0
    %876 = vmatpush1.msra.mxu0 %v771
    %877 = vmatprep.subr.mxu0 0.0
    %878 = vmatpush1.msra.mxu0 %v772
    %879 = vmatprep.subr.mxu0 0.0
    %880 = vmatpush1.msra.mxu0 %v773
    %881 = vmatprep.mubr.f32.mxu0 %v811
    %882 = vmatmul.mubr.f32.gmra.mrb[0].mxu0 %v807
    %v883 = vpop.f32.mrb[0].mxu0
    %v884 = vadd.f32 %v815, %v883
    %v885 = vpop.f32.mrb[0].mxu0
    %886 = vdwg.mxu0
    %v887 = vlaneseq
    %v888 = vshrl.u32 %v887, 7
    %v889 = vsub.s32 1, %v888
    %v890 = vrot.slane %v788, %v889
    %v891 = vlaneseq
    %v892 = vshrl.u32 %v891, 7
    %v893 = vsub.s32 1, %v892
    %v894 = vrot.slane %v792, %v893
    %v895 = vmul.f32 %v648, %v890
    %v896 = vmul.f32 %v649, %v894
    %v897 = vmul.f32 %v650, %v890
    %v898 = vmul.f32 %v651, %v894
    %v899 = vmul.f32 %v652, %v890
    %v900 = vmul.f32 %v653, %v894
    %v901 = vmul.f32 %v654, %v890
    %v902 = vmul.f32 %v655, %v894
    %v903 = vmul.f32 %v656, %v890
    %v904 = vmul.f32 %v657, %v894
    %v905 = vmul.f32 %v658, %v890
    %v906 = vmul.f32 %v659, %v894
    %v907 = vmul.f32 %v660, %v890
    %v908 = vmul.f32 %v661, %v894
    %v909 = vmul.f32 %v662, %v890
    %v910 = vmul.f32 %v663, %v894
    %v911 = vpack.c.bf16 %v897, %v895
    %v912 = vpack.c.bf16 %v898, %v896
    %v913 = vpack.c.bf16 %v901, %v899
    %v914 = vpack.c.bf16 %v902, %v900
    %v915 = vpack.c.bf16 %v905, %v903
    %v916 = vpack.c.bf16 %v906, %v904
    %v917 = vpack.c.bf16 %v909, %v907
    %v918 = vpack.c.bf16 %v910, %v908
    %v919 = vpack.c.bf16 %v743, %v742
    %v920 = vpack.c.bf16 %v745, %v744
    %v921 = vpack.c.bf16 %v747, %v746
    %v922 = vpack.c.bf16 %v749, %v748
    %v923 = vpack.c.bf16 %v751, %v750
    %v924 = vpack.c.bf16 %v753, %v752
    %v925 = vpack.c.bf16 %v755, %v754
    %v926 = vpack.c.bf16 %v757, %v756
    %v927 = vpack.c.bf16 %v759, %v758
    %v928 = vpack.c.bf16 %v761, %v760
    %v929 = vpack.c.bf16 %v763, %v762
    %v930 = vpack.c.bf16 %v765, %v764
    %v931 = vpack.c.bf16 %v767, %v766
    %v932 = vpack.c.bf16 %v769, %v768
    %v933 = vpack.c.bf16 %v771, %v770
    %v934 = vpack.c.bf16 %v773, %v772
    %v935 = vlaneseq
    %v936 = vshrl.u32 %v935, 7
    %v937 = vsub.s32 0, %v936
    %v938 = vrot.slane %v884, %v937
    %939 = vmatprep.subr.bf16.mxu0 0
    %940 = vmatpush1.bf16.msra.mxu0 %v919
    %941 = vmatprep.subr.bf16.mxu0 0
    %942 = vmatpush1.bf16.msra.mxu0 %v920
    %943 = vmatprep.subr.bf16.mxu0 0
    %944 = vmatpush1.bf16.msra.mxu0 %v921
    %945 = vmatprep.subr.bf16.mxu0 0
    %946 = vmatpush1.bf16.msra.mxu0 %v922
    %947 = vmatprep.subr.bf16.mxu0 0
    %948 = vmatpush1.bf16.msra.mxu0 %v923
    %949 = vmatprep.subr.bf16.mxu0 0
    %950 = vmatpush1.bf16.msra.mxu0 %v924
    %951 = vmatprep.subr.bf16.mxu0 0
    %952 = vmatpush1.bf16.msra.mxu0 %v925
    %953 = vmatprep.subr.bf16.mxu0 0
    %954 = vmatpush1.bf16.msra.mxu0 %v926
    %955 = vmatprep.subr.bf16.mxu0 0
    %956 = vmatpush1.bf16.msra.mxu0 %v927
    %957 = vmatprep.subr.bf16.mxu0 0
    %958 = vmatpush1.bf16.msra.mxu0 %v928
    %959 = vmatprep.subr.bf16.mxu0 0
    %960 = vmatpush1.bf16.msra.mxu0 %v929
    %961 = vmatprep.subr.bf16.mxu0 0
    %962 = vmatpush1.bf16.msra.mxu0 %v930
    %963 = vmatprep.subr.bf16.mxu0 0
    %964 = vmatpush1.bf16.msra.mxu0 %v931
    %965 = vmatprep.subr.bf16.mxu0 0
    %966 = vmatpush1.bf16.msra.mxu0 %v932
    %967 = vmatprep.subr.bf16.mxu0 0
    %968 = vmatpush1.bf16.msra.mxu0 %v933
    %969 = vmatprep.subr.bf16.mxu0 0
    %970 = vmatpush1.bf16.msra.mxu0 %v934
    %971 = vmatprep.mubr.bf16.mxu0 %v912
    %972 = vmatmul.mubr.bf16.gmra.mrb[0].mxu0 %v911
    %v973 = vpop.f32.mrb[0].mxu0
    %v974 = vadd.f32 %v938, %v973
    %v975 = vpop.f32.mrb[0].mxu0
    %v976 = vpop.f32.mrb[0].mxu0
    %v977 = vadd.f32 %v938, %v976
    %v978 = vpop.f32.mrb[0].mxu0
    %979 = vmatprep.mubr.bf16.mxu0 %v914
    %980 = vmatmul.mubr.bf16.gmra.mrb[0].mxu0 %v913
    %v981 = vpop.f32.mrb[0].mxu0
    %v982 = vadd.f32 %v938, %v981
    %v983 = vpop.f32.mrb[0].mxu0
    %v984 = vpop.f32.mrb[0].mxu0
    %v985 = vadd.f32 %v938, %v984
    %v986 = vpop.f32.mrb[0].mxu0
    %987 = vmatprep.mubr.bf16.mxu0 %v916
    %988 = vmatmul.mubr.bf16.gmra.mrb[0].mxu0 %v915
    %v989 = vpop.f32.mrb[0].mxu0
    %v990 = vadd.f32 %v938, %v989
    %v991 = vpop.f32.mrb[0].mxu0
    %v992 = vpop.f32.mrb[0].mxu0
    %v993 = vadd.f32 %v938, %v992
    %v994 = vpop.f32.mrb[0].mxu0
    %995 = vmatprep.mubr.bf16.mxu0 %v918
    %996 = vmatmul.mubr.bf16.gmra.mrb[0].mxu0 %v917
    %v997 = vpop.f32.mrb[0].mxu0
    %v998 = vadd.f32 %v938, %v997
    %v999 = vpop.f32.mrb[0].mxu0
    %v1000 = vpop.f32.mrb[0].mxu0
    %v1001 = vadd.f32 %v938, %v1000
    %v1002 = vpop.f32.mrb[0].mxu0
    %1003 = vdwg.mxu0
    %vm1004 = vcmp.ge.f32.partialorder %v974, 0.0
    %vm1005 = vcmp.ge.f32.partialorder %v977, 0.0
    %vm1006 = vcmp.ge.f32.partialorder %v982, 0.0
    %vm1007 = vcmp.ge.f32.partialorder %v985, 0.0
    %vm1008 = vcmp.ge.f32.partialorder %v990, 0.0
    %vm1009 = vcmp.ge.f32.partialorder %v993, 0.0
    %vm1010 = vcmp.ge.f32.partialorder %v998, 0.0
    %vm1011 = vcmp.ge.f32.partialorder %v1001, 0.0
    %v1012 = vmul.f32 %v974, 0.01
    %v1013 = vmul.f32 %v977, 0.01
    %v1014 = vmul.f32 %v982, 0.01
    %v1015 = vmul.f32 %v985, 0.01
    %v1016 = vmul.f32 %v990, 0.01
    %v1017 = vmul.f32 %v993, 0.01
    %v1018 = vmul.f32 %v998, 0.01
    %v1019 = vmul.f32 %v1001, 0.01
    %v1020 = vsel %vm1004, %v974, %v1012
    %v1021 = vsel %vm1005, %v977, %v1013
    %v1022 = vsel %vm1006, %v982, %v1014
    %v1023 = vsel %vm1007, %v985, %v1015
    %v1024 = vsel %vm1008, %v990, %v1016
    %v1025 = vsel %vm1009, %v993, %v1017
    %v1026 = vsel %vm1010, %v998, %v1018
    %v1027 = vsel %vm1011, %v1001, %v1019
    %1028 = vst [vmem:[%s7] sm:$0xff] %v1020
    %1029 = vst [vmem:[%s7 + $0x8] sm:$0xff] %v1021
    %1030 = vst [vmem:[%s7 + $0x10] sm:$0xff] %v1022
    %1031 = vst [vmem:[%s7 + $0x18] sm:$0xff] %v1023
    %1032 = vst [vmem:[%s7 + $0x20] sm:$0xff] %v1024
    %1033 = vst [vmem:[%s7 + $0x28] sm:$0xff] %v1025
    %1034 = vst [vmem:[%s7 + $0x30] sm:$0xff] %v1026
    %1035 = vst [vmem:[%s7 + $0x38] sm:$0xff] %v1027
    // Predicated region
    $region38: #{net_forward.1} parent=1 // pred_check
      _
    $region39: #{net_forward.1} parent=1 // pred_check_branch
      %1037 = sbr.rel (0) target = $region41
    $region40: #{net_forward.1} parent=1 // pred_region
      _
    $region41: #{net_forward.1} parent=1 // pred_fallthru
      _
    // Predicated region
    $region42: #{net_forward.1} parent=1 // pred_check
      _
    $region43: #{net_forward.1} parent=1 // pred_check_branch
      %1039 = sbr.rel (0) target = $region45
    $region44: #{net_forward.1} parent=1 // pred_region
      _
    $region45: #{net_forward.1} parent=1 // pred_fallthru
      _
    %1040 = vsyncpa [#allocation3], 1
    %1041 = vsyncpa [#allocation5], 1

</llo_original>
